<compile_context>
chip_gen: v7x
topology: tpu7x:2x2x1
jax: 0.10.0
libtpu: 0.0.40
codegen_flags: <defaults>
</compile_context>

<pallas_src>
import functools

import jax
import jax.numpy as jnp
from jax import lax
from jax.experimental import pallas as pl
from jax.experimental.pallas import tpu as pltpu

EPS = 1e-5
NEG_SLOPE = 0.1


def _round_up(v, m):
    return ((v + m - 1) // m) * m


def _vmem_budgets():
    """Generation-aware (fused-intermediate budget, vmem_limit_bytes)."""
    try:
        cap = int(pltpu.get_tpu_info().vmem_capacity_bytes)
    except Exception:
        cap = 64 * 1024 * 1024            # unknown platform: assume v7x-sized
    if cap >= 100 * 1024 * 1024:          # v5e / v6e: 128 MiB physical VMEM
        return 96 * 1024 * 1024, 110 * 1024 * 1024
    return 24 * 1024 * 1024, 32 * 1024 * 1024   # v7x: 64 MiB physical


# ----------------------------- Pallas kernels -----------------------------

def _fused_conv_bn_lrelu_kernel(x_ref, w_ref, gamma_ref, beta_ref, o_ref,
                                conv_ref, sum_ref, sq_ref, scale_ref,
                                shift_ref, *, m_total):
    """grid = (oc_tiles, 2, m_tiles): phase 0 = matmul+stats, phase 1 = BN+LReLU."""
    p = pl.program_id(1)
    i = pl.program_id(2)

    @pl.when((p == 0) & (i == 0))
    def _():
        sum_ref[...] = jnp.zeros_like(sum_ref)
        sq_ref[...] = jnp.zeros_like(sq_ref)
        # Output block is parked at (o, 0) through phase 0; write defined data
        # so any writeback of the parked block is benign (robustness).
        o_ref[...] = jnp.zeros_like(o_ref)

    @pl.when(p == 0)
    def _():
        # (oc_t, K) @ (K, tm) on the MXU, f32 accumulation.
        y = jnp.dot(w_ref[...], x_ref[...], preferred_element_type=jnp.float32)
        conv_ref[i] = y.astype(conv_ref.dtype)        # VMEM-resident tile
        # Per-channel stats from the *unrounded* f32 matmul result.
        # (XLU reductions; fold the plain sum onto the MXU only if profiling
        #  shows the XLU slot binding before the MXU.)
        sum_ref[...] += jnp.sum(y, axis=1, keepdims=True)
        sq_ref[...] += jnp.sum(y * y, axis=1, keepdims=True)

    @pl.when((p == 1) & (i == 0))
    def _():
        # Finalize per-channel affine once per OC tile (not per m tile).
        inv_m = 1.0 / m_total
        mean = sum_ref[...] * inv_m
        var = jnp.maximum(sq_ref[...] * inv_m - mean * mean, 0.0)  # biased BN var
        scale = gamma_ref[...] * lax.rsqrt(var + EPS)
        scale_ref[...] = scale
        shift_ref[...] = beta_ref[...] - mean * scale

    @pl.when(p == 1)
    def _():
        y = conv_ref[i].astype(jnp.float32)
        yn = y * scale_ref[...] + shift_ref[...]
        o_ref[...] = jnp.where(yn >= 0, yn, NEG_SLOPE * yn).astype(o_ref.dtype)


def _conv_stats_kernel(x_ref, w_ref, y_ref, sum_ref, sq_ref):
    """Fallback pass 1: matmul tile + per-channel sum / sum-of-squares."""
    # The (oc_t, 1) stat outputs stay resident across the m axis; that axis
    # must remain "arbitrary" (accumulation breaks under "parallel").
    @pl.when(pl.program_id(1) == 0)
    def _():
        sum_ref[...] = jnp.zeros_like(sum_ref)
        sq_ref[...] = jnp.zeros_like(sq_ref)

    y = jnp.dot(w_ref[...], x_ref[...], preferred_element_type=jnp.float32)
    y_ref[...] = y.astype(y_ref.dtype)          # bf16 HBM intermediate
    sum_ref[...] += jnp.sum(y, axis=1, keepdims=True)
    sq_ref[...] += jnp.sum(y * y, axis=1, keepdims=True)


def _bn_lrelu_kernel(y_ref, scale_ref, shift_ref, o_ref):
    """Fallback pass 2: y*scale + shift, then LeakyReLU(0.1)."""
    yn = y_ref[...].astype(jnp.float32) * scale_ref[...] + shift_ref[...]
    o_ref[...] = jnp.where(yn >= 0, yn, NEG_SLOPE * yn).astype(o_ref.dtype)


# ------------------------------ host wrapper -------------------------------

def _im2col_t(x, kh, kw, stride, pad):
    """x: (N, C, H, W) -> patches (K, M) with K=(C,KH,KW), M=(N,OH,OW)."""
    # TODO(synk): move this gather in-kernel (pl.ANY input + manual DMA over
    # overlapping H-window slabs); XLA still materializes a KH*KW-expanded
    # copy of the input here (now bf16, so half the previous bytes).
    n, c, h, w = x.shape
    xp = jnp.pad(x, ((0, 0), (0, 0), (pad, pad), (pad, pad)))
    oh = (h + 2 * pad - kh) // stride + 1
    ow = (w + 2 * pad - kw) // stride + 1
    cols = []
    for i in range(kh):
        for j in range(kw):
            cols.append(
                xp[:, :, i:i + stride * oh:stride, j:j + stride * ow:stride])
    cols = jnp.stack(cols, axis=2)                     # (N, C, KH*KW, OH, OW)
    cols = cols.reshape(n, c * kh * kw, oh * ow)       # K ordered (C, KH, KW)
    cols = cols.transpose(1, 0, 2).reshape(c * kh * kw, n * oh * ow)
    return cols, oh, ow


def cnn_block_forward(x, weight, gamma, beta, *, stride=1, padding=1, tm=512,
                      oc_tile=256, compute_dtype=jnp.bfloat16,
                      out_dtype=jnp.float32, oc_major_output=False,
                      force_two_pass=False):
    """x: (N, C_in, H, W) NCHW; weight: (OC, C_in, KH, KW).

    Returns NCHW `out_dtype` by default; with `oc_major_output=True` returns the
    (OC, N*OH*OW) slab directly (no epilogue transpose) for block chaining.
    """
    assert tm % 128 == 0, "row tile must be a multiple of the 128-lane width"
    n, c_in, h, w = x.shape
    oc, _, kh, kw = weight.shape

    # Cast *before* im2col: halves the materialized patch bytes and feeds the
    # MXU its native bf16 mode (accumulation stays f32).
    x = x.astype(compute_dtype)
    patches_t, oh, ow = _im2col_t(x, kh, kw, stride, padding)   # (K, M)
    k_dim, m = patches_t.shape

    # OC tiling: sublane-aligned, independent per-tile BN stats -> parallel axis.
    oc_p = _round_up(oc, 8)
    n_oct = max(1, -(-oc_p // oc_tile))
    oc_t = _round_up(-(-oc_p // n_oct), 8)
    oc_pad = n_oct * oc_t

    tm_eff = min(tm, _round_up(m, 128))           # lane-aligned m tile
    m_pad = _round_up(m, tm_eff)
    nt = m_pad // tm_eff

    # Zero-padding M is exact for batch statistics (adds 0 to both sums).
    patches_t = jnp.pad(patches_t, ((0, 0), (0, m_pad - m)))
    w_t = jnp.pad(weight.reshape(oc, c_in * kh * kw),
                  ((0, oc_pad - oc), (0, 0))).astype(compute_dtype)
    gamma_p = jnp.pad(gamma.astype(jnp.float32), (0, oc_pad - oc)).reshape(oc_pad, 1)
    beta_p = jnp.pad(beta.astype(jnp.float32), (0, oc_pad - oc)).reshape(oc_pad, 1)

    in_bytes = jnp.dtype(compute_dtype).itemsize
    out_bytes = jnp.dtype(out_dtype).itemsize
    budget, vmem_limit = _vmem_budgets()

    fused_vmem_bytes = (
        oc_t * m_pad * in_bytes            # VMEM-resident conv intermediate
        + 2 * k_dim * tm_eff * in_bytes    # double-buffered patch tiles
        + 2 * oc_t * tm_eff * out_bytes    # double-buffered output tiles
        + 2 * oc_t * k_dim * in_bytes      # double-buffered weight tile
        + 16 * oc_t * 4)                   # stat/affine scratch + gamma/beta bufs
    use_fused = (not force_two_pass) and fused_vmem_bytes < budget

    if use_fused:
        out_t = pl.pallas_call(
            functools.partial(_fused_conv_bn_lrelu_kernel, m_total=float(m)),
            out_shape=jax.ShapeDtypeStruct((oc_pad, m_pad), out_dtype),
            grid_spec=pltpu.PrefetchScalarGridSpec(
                num_scalar_prefetch=0,
                grid=(n_oct, 2, nt),
                in_specs=[
                    # patch tiles: walk M in phase 0; park on the LAST phase-0
                    # block in phase 1 (no wasted re-DMA at the transition).
                    pl.BlockSpec((k_dim, tm_eff),
                                 lambda o, p, i: (0, (1 - p) * i + p * (nt - 1))),
                    pl.BlockSpec((oc_t, k_dim), lambda o, p, i: (o, 0)),
                    pl.BlockSpec((oc_t, 1), lambda o, p, i: (o, 0)),
                    pl.BlockSpec((oc_t, 1), lambda o, p, i: (o, 0)),
                ],
                # Output parked at (o, 0) during phase 0 (zero-filled there),
                # walks lane-dense (oc_t, tm) blocks during phase 1.
                out_specs=pl.BlockSpec((oc_t, tm_eff), lambda o, p, i: (o, p * i)),
                scratch_shapes=[
                    pltpu.VMEM((nt, oc_t, tm_eff), compute_dtype),  # conv tiles
                    pltpu.VMEM((oc_t, 1), jnp.float32),             # sum
                    pltpu.VMEM((oc_t, 1), jnp.float32),             # sum of sq
                    pltpu.VMEM((oc_t, 1), jnp.float32),             # scale
                    pltpu.VMEM((oc_t, 1), jnp.float32),             # shift
                ]),
            compiler_params=pltpu.CompilerParams(
                # OC tiles are independent (per-channel BN) -> megacore-parallel
                # on v7x; phase / m-tile axes carry accumulators -> arbitrary.
                dimension_semantics=("parallel", "arbitrary", "arbitrary"),
                vmem_limit_bytes=vmem_limit),
        )(patches_t, w_t, gamma_p, beta_p)
    else:
        # Two-pass fallback: conv+stats (bf16 HBM intermediate), tiny host-side
        # finalize, then the elementwise BN+LeakyReLU pass.
        conv_t, ch_sum, ch_sq = pl.pallas_call(
            _conv_stats_kernel,
            out_shape=(jax.ShapeDtypeStruct((oc_pad, m_pad), compute_dtype),
                       jax.ShapeDtypeStruct((oc_pad, 1), jnp.float32),
                       jax.ShapeDtypeStruct((oc_pad, 1), jnp.float32)),
            grid_spec=pltpu.PrefetchScalarGridSpec(
                num_scalar_prefetch=0, grid=(n_oct, nt),
                in_specs=[pl.BlockSpec((k_dim, tm_eff), lambda o, i: (0, i)),
                          pl.BlockSpec((oc_t, k_dim), lambda o, i: (o, 0))],
                out_specs=(pl.BlockSpec((oc_t, tm_eff), lambda o, i: (o, i)),
                           pl.BlockSpec((oc_t, 1), lambda o, i: (o, 0)),
                           pl.BlockSpec((oc_t, 1), lambda o, i: (o, 0)))),
            compiler_params=pltpu.CompilerParams(
                dimension_semantics=("parallel", "arbitrary"),
                vmem_limit_bytes=vmem_limit),
        )(patches_t, w_t)

        inv_m = 1.0 / float(m)
        mean = ch_sum * inv_m
        var = jnp.maximum(ch_sq * inv_m - mean * mean, 0.0)
        scale = gamma_p * lax.rsqrt(var + EPS)
        shift = beta_p - mean * scale

        out_t = pl.pallas_call(
            _bn_lrelu_kernel,
            out_shape=jax.ShapeDtypeStruct((oc_pad, m_pad), out_dtype),
            grid_spec=pltpu.PrefetchScalarGridSpec(
                num_scalar_prefetch=0, grid=(n_oct, nt),
                in_specs=[pl.BlockSpec((oc_t, tm_eff), lambda o, i: (o, i)),
                          pl.BlockSpec((oc_t, 1), lambda o, i: (o, 0)),
                          pl.BlockSpec((oc_t, 1), lambda o, i: (o, 0))],
                out_specs=pl.BlockSpec((oc_t, tm_eff), lambda o, i: (o, i))),
            compiler_params=pltpu.CompilerParams(
                dimension_semantics=("parallel", "parallel"),
                vmem_limit_bytes=vmem_limit),
        )(conv_t, scale, shift)

    if oc_major_output:
        # Keep the lane-dense (OC, N*OH*OW) layout for chaining CNN blocks
        # (the next block's im2col can consume it without an NCHW transpose).
        return out_t[:oc, :m]
    # (OC_pad, M_pad) -> (N, OC, OH, OW); touches only the true-size output.
    out = out_t[:oc, :m].reshape(oc, n, oh, ow).transpose(1, 0, 2, 3)
    return out


# ------------------------------ reference ----------------------------------

def cnn_block_reference(x, weight, gamma, beta, *, stride=1, padding=1):
    conv = lax.conv_general_dilated(
        x.astype(jnp.float32), weight.astype(jnp.float32),
        window_strides=(stride, stride),
        padding=((padding, padding), (padding, padding)),
        dimension_numbers=("NCHW", "OIHW", "NCHW"))
    mean = conv.mean(axis=(0, 2, 3), keepdims=True)
    var = conv.var(axis=(0, 2, 3), keepdims=True)   # biased, like PT train BN
    norm = (conv - mean) * lax.rsqrt(var + EPS)
    norm = norm * gamma.reshape(1, -1, 1, 1) + beta.reshape(1, -1, 1, 1)
    return jnp.where(norm >= 0, norm, NEG_SLOPE * norm)


# --------------------------------- main -------------------------------------

if __name__ == "__main__":
    # CNNBlock(in_channels=4, out_channels=8, kernel_size=3, stride=1, padding=1)
    N, C_IN, H, W = 2, 4, 16, 16
    OC, KH, KW = 8, 3, 3

    key = jax.random.PRNGKey(0)
    kx, kw_, kg, kb = jax.random.split(key, 4)
    x = jax.random.normal(kx, (N, C_IN, H, W), dtype=jnp.float32)
    weight = jax.random.normal(kw_, (OC, C_IN, KH, KW), dtype=jnp.float32) * 0.1
    gamma = 1.0 + 0.1 * jax.random.normal(kg, (OC,), dtype=jnp.float32)
    beta = 0.1 * jax.random.normal(kb, (OC,), dtype=jnp.float32)

    ref = cnn_block_reference(x, weight, gamma, beta, stride=1, padding=1)

    # Default path: fused single kernel, bf16 MXU inputs (f32 accumulation).
    out = jax.block_until_ready(cnn_block_forward(
        x, weight, gamma, beta, stride=1, padding=1))
    assert out.shape == (N, OC, H, W), out.shape
    assert out.dtype == jnp.float32, out.dtype
    assert jnp.allclose(out, ref, atol=5e-2, rtol=5e-2), float(
        jnp.max(jnp.abs(out - ref)))

    # Fused path with f32 MXU inputs and a multi-tile m grid (tight tolerance).
    out_f32 = jax.block_until_ready(cnn_block_forward(
        x, weight, gamma, beta, stride=1, padding=1, tm=128,
        compute_dtype=jnp.float32))
    assert jnp.allclose(out_f32, ref, atol=2e-3, rtol=2e-3), float(
        jnp.max(jnp.abs(out_f32 - ref)))

    # Two-pass fallback path (bf16 HBM intermediate), exercised explicitly.
    out_2p = jax.block_until_ready(cnn_block_forward(
        x, weight, gamma, beta, stride=1, padding=1, tm=256,
        force_two_pass=True))
    assert jnp.allclose(out_2p, ref, atol=5e-2, rtol=5e-2), float(
        jnp.max(jnp.abs(out_2p - ref)))

    print("KERNEL_OK")
</pallas_src>

<mosaic_0001>
module attributes {stable_mosaic.version = 11 : i64} {
  func.func @_fused_conv_bn_lrelu_kernel(%arg0: i32, %arg1: i32, %arg2: i32, %arg3: memref<36x512xbf16, #tpu.memory_space<vmem>>, %arg4: memref<8x36xbf16, #tpu.memory_space<vmem>>, %arg5: memref<8x1xf32, #tpu.memory_space<vmem>>, %arg6: memref<8x1xf32, #tpu.memory_space<vmem>>, %arg7: memref<8x512xf32, #tpu.memory_space<vmem>>, %arg8: memref<1x8x512xbf16, #tpu.memory_space<vmem>>, %arg9: memref<8x1xf32, #tpu.memory_space<vmem>>, %arg10: memref<8x1xf32, #tpu.memory_space<vmem>>, %arg11: memref<8x1xf32, #tpu.memory_space<vmem>>, %arg12: memref<8x1xf32, #tpu.memory_space<vmem>>) attributes {dimension_semantics = [#tpu.dimension_semantics<parallel>, #tpu.dimension_semantics<arbitrary>, #tpu.dimension_semantics<arbitrary>], iteration_bounds = array<i64: 1, 2, 1>, scalar_prefetch = 0 : i64, scratch_operands = 5 : i64, tpu.core_type = #tpu.core_type<tc>, window_params = [{transform_indices = @transform_0, window_bounds = array<i64: 36, 512>}, {transform_indices = @transform_1, window_bounds = array<i64: 8, 36>}, {transform_indices = @transform_2, window_bounds = array<i64: 8, 1>}, {transform_indices = @transform_3, window_bounds = array<i64: 8, 1>}, {transform_indices = @transform_4, window_bounds = array<i64: 8, 512>}]} {
    %c0_i32 = arith.constant 0 : i32
    %0 = arith.cmpi eq, %arg1, %c0_i32 : i32
    %c0_i32_0 = arith.constant 0 : i32
    %1 = arith.cmpi eq, %arg2, %c0_i32_0 : i32
    %2 = arith.andi %0, %1 : i1
    %3 = arith.extui %2 : i1 to i32
    %c0_i32_1 = arith.constant 0 : i32
    %4 = arith.cmpi ne, %3, %c0_i32_1 : i32
    scf.if %4 {
      %cst = arith.constant 0.000000e+00 : f32
      %16 = vector.broadcast %cst : f32 to vector<8x1xf32>
      %c0 = arith.constant 0 : index
      %c0_8 = arith.constant 0 : index
      %17 = vector.load %arg9[%c0, %c0_8] : memref<8x1xf32, #tpu.memory_space<vmem>>, vector<8x1xf32>
      tpu.vector_store %arg9[%c0, %c0_8], %16 {strides = array<i32>} : memref<8x1xf32, #tpu.memory_space<vmem>>, vector<8x1xf32>,
      %cst_9 = arith.constant 0.000000e+00 : f32
      %18 = vector.broadcast %cst_9 : f32 to vector<8x1xf32>
      %c0_10 = arith.constant 0 : index
      %c0_11 = arith.constant 0 : index
      %19 = vector.load %arg10[%c0_10, %c0_11] : memref<8x1xf32, #tpu.memory_space<vmem>>, vector<8x1xf32>
      tpu.vector_store %arg10[%c0_10, %c0_11], %18 {strides = array<i32>} : memref<8x1xf32, #tpu.memory_space<vmem>>, vector<8x1xf32>,
      %cst_12 = arith.constant 0.000000e+00 : f32
      %20 = vector.broadcast %cst_12 : f32 to vector<8x512xf32>
      %c0_13 = arith.constant 0 : index
      %c0_14 = arith.constant 0 : index
      %21 = vector.load %arg7[%c0_13, %c0_14] : memref<8x512xf32, #tpu.memory_space<vmem>>, vector<8x512xf32>
      tpu.vector_store %arg7[%c0_13, %c0_14], %20 {strides = array<i32>} : memref<8x512xf32, #tpu.memory_space<vmem>>, vector<8x512xf32>,
    } else {
    }
    %c0_i32_2 = arith.constant 0 : i32
    %5 = arith.cmpi eq, %arg1, %c0_i32_2 : i32
    %6 = arith.extui %5 : i1 to i32
    %c0_i32_3 = arith.constant 0 : i32
    %7 = arith.cmpi ne, %6, %c0_i32_3 : i32
    scf.if %7 {
      %c0 = arith.constant 0 : index
      %c0_8 = arith.constant 0 : index
      %16 = vector.load %arg4[%c0, %c0_8] : memref<8x36xbf16, #tpu.memory_space<vmem>>, vector<8x36xbf16>
      %c0_9 = arith.constant 0 : index
      %c0_10 = arith.constant 0 : index
      %17 = vector.load %arg3[%c0_9, %c0_10] : memref<36x512xbf16, #tpu.memory_space<vmem>>, vector<36x512xbf16>
      %cst = arith.constant dense<0.000000e+00> : vector<8x512xf32>
      %18 = tpu.matmul %16, %17, %cst {dimension_numbers = #tpu.dot_dimension_numbers<[1], [0], [0], [1], [0, 0, 1, 1], [], []>} : vector<8x36xbf16>, vector<36x512xbf16>, vector<8x512xf32> -> vector<8x512xf32>
      %19 = arith.truncf %18 : vector<8x512xf32> to vector<8x512xbf16>
      %20 = arith.index_cast %arg2 : i32 to index
      %c0_11 = arith.constant 0 : index
      %c0_12 = arith.constant 0 : index
      %21 = vector.load %arg8[%20, %c0_11, %c0_12] : memref<1x8x512xbf16, #tpu.memory_space<vmem>>, vector<1x8x512xbf16>
      %22 = vector.shape_cast %21 : vector<1x8x512xbf16> to vector<8x512xbf16>
      %23 = vector.shape_cast %19 : vector<8x512xbf16> to vector<1x8x512xbf16>
      tpu.vector_store %arg8[%20, %c0_11, %c0_12], %23 {strides = array<i32>} : memref<1x8x512xbf16, #tpu.memory_space<vmem>>, vector<1x8x512xbf16>,
      %c0_13 = arith.constant 0 : index
      %c0_14 = arith.constant 0 : index
      %24 = vector.load %arg9[%c0_13, %c0_14] : memref<8x1xf32, #tpu.memory_space<vmem>>, vector<8x1xf32>
      %cst_15 = arith.constant dense<0.000000e+00> : vector<8xf32>
      %25 = vector.multi_reduction <add>, %18, %cst_15 [1] : vector<8x512xf32> to vector<8xf32>
      %26 = vector.shape_cast %25 : vector<8xf32> to vector<8x1xf32>
      %27 = arith.addf %24, %26 : vector<8x1xf32>
      %c0_16 = arith.constant 0 : index
      %c0_17 = arith.constant 0 : index
      %28 = vector.load %arg9[%c0_16, %c0_17] : memref<8x1xf32, #tpu.memory_space<vmem>>, vector<8x1xf32>
      tpu.vector_store %arg9[%c0_16, %c0_17], %27 {strides = array<i32>} : memref<8x1xf32, #tpu.memory_space<vmem>>, vector<8x1xf32>,
      %c0_18 = arith.constant 0 : index
      %c0_19 = arith.constant 0 : index
      %29 = vector.load %arg10[%c0_18, %c0_19] : memref<8x1xf32, #tpu.memory_space<vmem>>, vector<8x1xf32>
      %30 = arith.mulf %18, %18 : vector<8x512xf32>
      %cst_20 = arith.constant dense<0.000000e+00> : vector<8xf32>
      %31 = vector.multi_reduction <add>, %30, %cst_20 [1] : vector<8x512xf32> to vector<8xf32>
      %32 = vector.shape_cast %31 : vector<8xf32> to vector<8x1xf32>
      %33 = arith.addf %29, %32 : vector<8x1xf32>
      %c0_21 = arith.constant 0 : index
      %c0_22 = arith.constant 0 : index
      %34 = vector.load %arg10[%c0_21, %c0_22] : memref<8x1xf32, #tpu.memory_space<vmem>>, vector<8x1xf32>
      tpu.vector_store %arg10[%c0_21, %c0_22], %33 {strides = array<i32>} : memref<8x1xf32, #tpu.memory_space<vmem>>, vector<8x1xf32>,
    } else {
    }
    %c1_i32 = arith.constant 1 : i32
    %8 = arith.cmpi eq, %arg1, %c1_i32 : i32
    %c0_i32_4 = arith.constant 0 : i32
    %9 = arith.cmpi eq, %arg2, %c0_i32_4 : i32
    %10 = arith.andi %8, %9 : i1
    %11 = arith.extui %10 : i1 to i32
    %c0_i32_5 = arith.constant 0 : i32
    %12 = arith.cmpi ne, %11, %c0_i32_5 : i32
    scf.if %12 {
      %c0 = arith.constant 0 : index
      %c0_8 = arith.constant 0 : index
      %16 = vector.load %arg9[%c0, %c0_8] : memref<8x1xf32, #tpu.memory_space<vmem>>, vector<8x1xf32>
      %cst = arith.constant 0.001953125 : f32
      %17 = vector.broadcast %cst : f32 to vector<8x1xf32>
      %18 = arith.mulf %16, %17 : vector<8x1xf32>
      %c0_9 = arith.constant 0 : index
      %c0_10 = arith.constant 0 : index
      %19 = vector.load %arg10[%c0_9, %c0_10] : memref<8x1xf32, #tpu.memory_space<vmem>>, vector<8x1xf32>
      %cst_11 = arith.constant 0.001953125 : f32
      %20 = vector.broadcast %cst_11 : f32 to vector<8x1xf32>
      %21 = arith.mulf %19, %20 : vector<8x1xf32>
      %22 = arith.mulf %18, %18 : vector<8x1xf32>
      %23 = arith.subf %21, %22 : vector<8x1xf32>
      %cst_12 = arith.constant 0.000000e+00 : f32
      %24 = vector.broadcast %cst_12 : f32 to vector<8x1xf32>
      %25 = arith.maximumf %23, %24 : vector<8x1xf32>
      %c0_13 = arith.constant 0 : index
      %c0_14 = arith.constant 0 : index
      %26 = vector.load %arg5[%c0_13, %c0_14] : memref<8x1xf32, #tpu.memory_space<vmem>>, vector<8x1xf32>
      %cst_15 = arith.constant 9.99999974E-6 : f32
      %27 = vector.broadcast %cst_15 : f32 to vector<8x1xf32>
      %28 = arith.addf %25, %27 : vector<8x1xf32>
      %29 = math.rsqrt %28 : vector<8x1xf32>
      %30 = arith.mulf %26, %29 : vector<8x1xf32>
      %c0_16 = arith.constant 0 : index
      %c0_17 = arith.constant 0 : index
      %31 = vector.load %arg11[%c0_16, %c0_17] : memref<8x1xf32, #tpu.memory_space<vmem>>, vector<8x1xf32>
      tpu.vector_store %arg11[%c0_16, %c0_17], %30 {strides = array<i32>} : memref<8x1xf32, #tpu.memory_space<vmem>>, vector<8x1xf32>,
      %c0_18 = arith.constant 0 : index
      %c0_19 = arith.constant 0 : index
      %32 = vector.load %arg6[%c0_18, %c0_19] : memref<8x1xf32, #tpu.memory_space<vmem>>, vector<8x1xf32>
      %33 = arith.mulf %18, %30 : vector<8x1xf32>
      %34 = arith.subf %32, %33 : vector<8x1xf32>
      %c0_20 = arith.constant 0 : index
      %c0_21 = arith.constant 0 : index
      %35 = vector.load %arg12[%c0_20, %c0_21] : memref<8x1xf32, #tpu.memory_space<vmem>>, vector<8x1xf32>
      tpu.vector_store %arg12[%c0_20, %c0_21], %34 {strides = array<i32>} : memref<8x1xf32, #tpu.memory_space<vmem>>, vector<8x1xf32>,
    } else {
    }
    %c1_i32_6 = arith.constant 1 : i32
    %13 = arith.cmpi eq, %arg1, %c1_i32_6 : i32
    %14 = arith.extui %13 : i1 to i32
    %c0_i32_7 = arith.constant 0 : i32
    %15 = arith.cmpi ne, %14, %c0_i32_7 : i32
    scf.if %15 {
      %16 = arith.index_cast %arg2 : i32 to index
      %c0 = arith.constant 0 : index
      %c0_8 = arith.constant 0 : index
      %17 = vector.load %arg8[%16, %c0, %c0_8] : memref<1x8x512xbf16, #tpu.memory_space<vmem>>, vector<1x8x512xbf16>
      %18 = vector.shape_cast %17 : vector<1x8x512xbf16> to vector<8x512xbf16>
      %19 = arith.extf %18 : vector<8x512xbf16> to vector<8x512xf32>
      %c0_9 = arith.constant 0 : index
      %c0_10 = arith.constant 0 : index
      %20 = vector.load %arg11[%c0_9, %c0_10] : memref<8x1xf32, #tpu.memory_space<vmem>>, vector<8x1xf32>
      %21 = vector.broadcast %20 : vector<8x1xf32> to vector<8x512xf32>
      %22 = arith.mulf %19, %21 : vector<8x512xf32>
      %c0_11 = arith.constant 0 : index
      %c0_12 = arith.constant 0 : index
      %23 = vector.load %arg12[%c0_11, %c0_12] : memref<8x1xf32, #tpu.memory_space<vmem>>, vector<8x1xf32>
      %24 = vector.broadcast %23 : vector<8x1xf32> to vector<8x512xf32>
      %25 = arith.addf %22, %24 : vector<8x512xf32>
      %cst = arith.constant 0.000000e+00 : f32
      %26 = vector.broadcast %cst : f32 to vector<8x512xf32>
      %27 = arith.cmpf oge, %25, %26 : vector<8x512xf32>
      %cst_13 = arith.constant 1.000000e-01 : f32
      %28 = vector.broadcast %cst_13 : f32 to vector<8x512xf32>
      %29 = arith.mulf %28, %25 : vector<8x512xf32>
      %30 = arith.select %27, %25, %29 : vector<8x512xi1>, vector<8x512xf32>
      %c0_14 = arith.constant 0 : index
      %c0_15 = arith.constant 0 : index
      %31 = vector.load %arg7[%c0_14, %c0_15] : memref<8x512xf32, #tpu.memory_space<vmem>>, vector<8x512xf32>
      tpu.vector_store %arg7[%c0_14, %c0_15], %30 {strides = array<i32>} : memref<8x512xf32, #tpu.memory_space<vmem>>, vector<8x512xf32>,
    } else {
    }
    return
  }
  func.func @transform_0(%arg0: i32, %arg1: i32, %arg2: i32) -> (i32, i32) {
    %c1_i32 = arith.constant 1 : i32
    %0 = arith.subi %c1_i32, %arg1 : i32
    %1 = arith.muli %0, %arg2 : i32
    %c0_i32 = arith.constant 0 : i32
    %2 = arith.muli %arg1, %c0_i32 : i32
    %3 = arith.addi %1, %2 : i32
    %c0_i32_0 = arith.constant 0 : i32
    %c0_i32_1 = arith.constant 0 : i32
    return %c0_i32_0, %3 : i32, i32
  }
  func.func @transform_1(%arg0: i32, %arg1: i32, %arg2: i32) -> (i32, i32) {
    %c0_i32 = arith.constant 0 : i32
    %c0_i32_0 = arith.constant 0 : i32
    return %arg0, %c0_i32 : i32, i32
  }
  func.func @transform_2(%arg0: i32, %arg1: i32, %arg2: i32) -> (i32, i32) {
    %c0_i32 = arith.constant 0 : i32
    %c0_i32_0 = arith.constant 0 : i32
    return %arg0, %c0_i32 : i32, i32
  }
  func.func @transform_3(%arg0: i32, %arg1: i32, %arg2: i32) -> (i32, i32) {
    %c0_i32 = arith.constant 0 : i32
    %c0_i32_0 = arith.constant 0 : i32
    return %arg0, %c0_i32 : i32, i32
  }
  func.func @transform_4(%arg0: i32, %arg1: i32, %arg2: i32) -> (i32, i32) {
    %0 = arith.muli %arg1, %arg2 : i32
    %c0_i32 = arith.constant 0 : i32
    return %arg0, %0 : i32, i32
  }
}

</mosaic_0001>

<llo_original>
// kernel: tpu_custom_call.1
$region0: #{tpu_custom_call.1}
  #allocation0 [shape = 'u32[]', space=smem, size = 0x4, offset = 0x4, fixed_abs, tag = 'smem constant byte address 0x4 - core index']
  #allocation1 [shape = 'u32[144,128]{1,0:T(1,128)}', space=vmem, size = 0x12000, scoped, tag = 'internal scratch']
  #allocation2 [shape = 'bf16[1,8,512]{2,1,0:T(8,128)(2,1)}', space=vmem, size = 0x2000, scoped, tag = 'scratch operand']
  #allocation3 [shape = 'f32[8,1]{1,0:T(8,128)}', space=vmem, size = 0x1000, scoped, tag = 'scratch operand']
  #allocation4 [shape = 'f32[8,1]{1,0:T(8,128)}', space=vmem, size = 0x1000, scoped, tag = 'scratch operand']
  #allocation5 [shape = 'f32[8,1]{1,0:T(8,128)}', space=vmem, size = 0x1000, scoped, tag = 'scratch operand']
  #allocation6 [shape = 'f32[8,1]{1,0:T(8,128)}', space=vmem, size = 0x1000, scoped, tag = 'scratch operand']
  %s0 = inlined_call_operand.hbm [shape: bf16[36,512], index: 0, kind: input, shape index: {}]
  %s1 = inlined_call_operand.vmem [shape: bf16[8,36], index: 1, kind: input, shape index: {}]
  %s2 = inlined_call_operand.vmem [shape: f32[8,1], index: 2, kind: input, shape index: {}]
  %s3 = inlined_call_operand.vmem [shape: f32[8,1], index: 3, kind: input, shape index: {}]
  %s4 = inlined_call_operand.hbm [shape: f32[8,512], index: 4, kind: output, shape index: {}]
  %s5 = sld [smem:[#allocation0]]
  $region69: #{tpu_custom_call.1} parent=0
    _
  %s7 = ssub.s32 1, %s5
  %s8 = scalar_select 0, %s7, %s5
  $region1: #{tpu_custom_call.1} parent=0
    #allocation7 [shape = 'u8[81920]{0}', space=vmem, size = 0x14000, scoped, tag = 'input window, operand 0']
    #allocation8 [shape = 's32[2]{0}', space=sflag, size = 0x8, scoped, tag = 'scoped memory for tpu_custom_call.1']
    #allocation9 [shape = 's32[2]{0}', space=sflag, size = 0x8, scoped, tag = 'scoped memory for tpu_custom_call.1']
    #allocation10 [shape = 'u8[32768]{0}', space=vmem, size = 0x8000, scoped, tag = 'output window, operand 0']
    %9 = vsyncpa [#allocation8], 0
    %s10 = scalar_lea.sflag [#allocation8], 1
    %11 = vsyncpa %s10, 0
    %12 = vsyncpa [#allocation9], 0
    %s13 = scalar_lea.sflag [#allocation9], 1
    %14 = vsyncpa %s13, 0
    loop: start=0, step=1, limit=4
    $region2: #{tpu_custom_call.1} parent=1 // loop_pre_header
      _
    $region3: #{tpu_custom_call.1} parent=1 // loop_header
      %s16 = sphi 0, %s20
      %p17 = scmp.ge.s32.totalorder %s16, 4
      %s23 = sphi 0, %s42
      %s24 = sphi 0, %s38
      %s25 = sphi 0, %s34
      %s26 = sphi 0, %s23
      %s27 = sphi 0, %s24
      %s28 = sphi 0, %s25
      %s29 = sphi 0, %s26
      %s30 = sphi 0, %s27
      %s31 = sphi 0, %s28
      %s49 = sphi 0, %s51
      %s52 = sphi 0, %s49
      %s53 = sphi 0, %s52
      %s69 = sphi 0, %s53
      %s75 = sphi 0, %s77
      %s78 = sphi 0, %s75
      %s79 = sphi 0, %s78
      %s95 = sphi 0, %s79
      %s101 = sphi 0, %s103
      %s104 = sphi 0, %s101
      %s105 = sphi 0, %s104
      %s121 = sphi 0, %s105
      %s127 = sphi 0, %s129
      %s130 = sphi 0, %s127
      %s131 = sphi 0, %s130
      %s147 = sphi 0, %s131
      %s157 = sphi 0, %s159
      %s160 = sphi 0, %s157
      %s161 = sphi 0, %s160
      %s177 = sphi 0, %s161
    $region4: #{tpu_custom_call.1} parent=1 // loop_header_branch
      %19 = sbr.rel (%p17) target = $region8
    $region5: #{tpu_custom_call.1} parent=1 // loop_body
      %s21 = ssub.s32 %s16, 1
      %s22 = ssub.s32 %s16, 2
      %s32 = sadd.s32 1, %s25
      %p33 = scmp.ge.s32.totalorder %s32, 1
      %s34 = scalar_select %p33, 0, %s32
      %s35 = sadd.s32 1, %s24
      %s36 = scalar_select %p33, %s35, %s24
      %p37 = scmp.ge.s32.totalorder %s36, 2
      %s38 = scalar_select %p37, 0, %s36
      %s39 = sadd.s32 1, %s23
      %s40 = scalar_select %p37, %s39, %s23
      %p41 = scmp.ge.s32.totalorder %s40, 1
      %s42 = scalar_select %p41, 0, %s40
      %s43 = ssub.s32 1, %s24
      %s44 = smul.u32 %s43, %s25
      %s45 = ssub.s32 1, %s38
      %s46 = smul.u32 %s45, %s34
      %s47 = ssub.s32 %s44, %s46
      %p48 = scmp.eq.s32.totalorder %s47, 0
      %s50 = sadd.s32 %s49, 1
      %s51 = scalar_select %p48, %s49, %s50
      %p54 = pneg %p48
      %p55 = scmp.eq.s32.totalorder %s16, 1
      %p56 = por %p54, %p55
      %p57 = scmp.ne.s32.totalorder %s49, %s52
      %p58 = scmp.eq.s32.totalorder %s16, 0
      %p59 = por %p57, %p58
      %p60 = scmp.ne.s32.totalorder %s49, %s52
      %p61 = scmp.eq.s32.totalorder %s21, 1
      %p62 = por %p60, %p61
      %p63 = scmp.ne.s32.totalorder %s52, %s53
      %p64 = scmp.eq.s32.totalorder %s21, 0
      %p65 = por %p63, %p64
      %p66 = scmp.ne.s32.totalorder %s52, %s53
      %p67 = scmp.eq.s32.totalorder %s22, 1
      %p68 = por %p66, %p67
      %p70 = scmp.ne.s32.totalorder %s53, %s69
      %p71 = scmp.eq.s32.totalorder %s22, 0
      %p72 = por %p70, %p71
      %s73 = ssub.s32 %s23, %s42
      %p74 = scmp.eq.s32.totalorder %s73, 0
      %s76 = sadd.s32 %s75, 1
      %s77 = scalar_select %p74, %s75, %s76
      %p80 = pneg %p74
      %p81 = scmp.eq.s32.totalorder %s16, 1
      %p82 = por %p80, %p81
      %p83 = scmp.ne.s32.totalorder %s75, %s78
      %p84 = scmp.eq.s32.totalorder %s16, 0
      %p85 = por %p83, %p84
      %p86 = scmp.ne.s32.totalorder %s75, %s78
      %p87 = scmp.eq.s32.totalorder %s21, 1
      %p88 = por %p86, %p87
      %p89 = scmp.ne.s32.totalorder %s78, %s79
      %p90 = scmp.eq.s32.totalorder %s21, 0
      %p91 = por %p89, %p90
      %p92 = scmp.ne.s32.totalorder %s78, %s79
      %p93 = scmp.eq.s32.totalorder %s22, 1
      %p94 = por %p92, %p93
      %p96 = scmp.ne.s32.totalorder %s79, %s95
      %p97 = scmp.eq.s32.totalorder %s22, 0
      %p98 = por %p96, %p97
      %s99 = ssub.s32 %s23, %s42
      %p100 = scmp.eq.s32.totalorder %s99, 0
      %s102 = sadd.s32 %s101, 1
      %s103 = scalar_select %p100, %s101, %s102
      %p106 = pneg %p100
      %p107 = scmp.eq.s32.totalorder %s16, 1
      %p108 = por %p106, %p107
      %p109 = scmp.ne.s32.totalorder %s101, %s104
      %p110 = scmp.eq.s32.totalorder %s16, 0
      %p111 = por %p109, %p110
      %p112 = scmp.ne.s32.totalorder %s101, %s104
      %p113 = scmp.eq.s32.totalorder %s21, 1
      %p114 = por %p112, %p113
      %p115 = scmp.ne.s32.totalorder %s104, %s105
      %p116 = scmp.eq.s32.totalorder %s21, 0
      %p117 = por %p115, %p116
      %p118 = scmp.ne.s32.totalorder %s104, %s105
      %p119 = scmp.eq.s32.totalorder %s22, 1
      %p120 = por %p118, %p119
      %p122 = scmp.ne.s32.totalorder %s105, %s121
      %p123 = scmp.eq.s32.totalorder %s22, 0
      %p124 = por %p122, %p123
      %s125 = ssub.s32 %s23, %s42
      %p126 = scmp.eq.s32.totalorder %s125, 0
      %s128 = sadd.s32 %s127, 1
      %s129 = scalar_select %p126, %s127, %s128
      %p132 = pneg %p126
      %p133 = scmp.eq.s32.totalorder %s16, 1
      %p134 = por %p132, %p133
      %p135 = scmp.ne.s32.totalorder %s127, %s130
      %p136 = scmp.eq.s32.totalorder %s16, 0
      %p137 = por %p135, %p136
      %p138 = scmp.ne.s32.totalorder %s127, %s130
      %p139 = scmp.eq.s32.totalorder %s21, 1
      %p140 = por %p138, %p139
      %p141 = scmp.ne.s32.totalorder %s130, %s131
      %p142 = scmp.eq.s32.totalorder %s21, 0
      %p143 = por %p141, %p142
      %p144 = scmp.ne.s32.totalorder %s130, %s131
      %p145 = scmp.eq.s32.totalorder %s22, 1
      %p146 = por %p144, %p145
      %p148 = scmp.ne.s32.totalorder %s131, %s147
      %p149 = scmp.eq.s32.totalorder %s22, 0
      %p150 = por %p148, %p149
      %s151 = smul.u32 %s24, %s25
      %s152 = smul.u32 %s38, %s34
      %s153 = ssub.s32 %s23, %s42
      %s154 = ssub.s32 %s151, %s152
      %s155 = sor.u32 %s153, %s154
      %p156 = scmp.eq.s32.totalorder %s155, 0
      %s158 = sadd.s32 %s157, 1
      %s159 = scalar_select %p156, %s157, %s158
      %p162 = pneg %p156
      %p163 = scmp.eq.s32.totalorder %s16, 1
      %p164 = por %p162, %p163
      %p165 = scmp.ne.s32.totalorder %s157, %s160
      %p166 = scmp.eq.s32.totalorder %s16, 0
      %p167 = por %p165, %p166
      %p168 = scmp.ne.s32.totalorder %s157, %s160
      %p169 = scmp.eq.s32.totalorder %s21, 1
      %p170 = por %p168, %p169
      %p171 = scmp.ne.s32.totalorder %s160, %s161
      %p172 = scmp.eq.s32.totalorder %s21, 0
      %p173 = por %p171, %p172
      %p174 = scmp.ne.s32.totalorder %s160, %s161
      %p175 = scmp.eq.s32.totalorder %s22, 1
      %p176 = por %p174, %p175
      %p178 = scmp.ne.s32.totalorder %s161, %s177
      %p179 = scmp.eq.s32.totalorder %s22, 0
      %p180 = por %p178, %p179
      %p181 = scmp.le.s32.totalorder 1, %s16
      %p182 = scmp.lt.s32.totalorder %s16, 3
      %p183 = pnand %p181, %p182
      %p184 = pneg %p183
      // Predicated region
      $region9: #{tpu_custom_call.1} parent=5 // pred_check
        _
      $region10: #{tpu_custom_call.1} parent=5 // pred_check_branch
        %186 = sbr.rel (%p183) target = $region12
      $region11: #{tpu_custom_call.1} parent=5 // pred_region
        %s187 = ssub.s32 %s16, 1
        // Predicated region
        $region13: #{tpu_custom_call.1} parent=11 // pred_check
          %p188 = pneg %p91
        $region14: #{tpu_custom_call.1} parent=11 // pred_check_branch
          %190 = sbr.rel (%p188) target = $region16
        $region15: #{tpu_custom_call.1} parent=11 // pred_region
          %p191 = scmp.lt.s32.totalorder %s26, 0
          %s192 = scalar_select %p191, %s26, 0
          %s193 = smul.addr %s192, 4
          %s194 = scalar_lea.vmem %s1, %s193
        $region16: #{tpu_custom_call.1} parent=11 // pred_fallthru
          _
        // Predicated region
        $region17: #{tpu_custom_call.1} parent=11 // pred_check
          %p195 = pneg %p117
        $region18: #{tpu_custom_call.1} parent=11 // pred_check_branch
          %197 = sbr.rel (%p195) target = $region20
        $region19: #{tpu_custom_call.1} parent=11 // pred_region
          %p198 = scmp.lt.s32.totalorder %s26, 0
          %s199 = scalar_select %p198, %s26, 0
          %s200 = smul.addr %s199, 8
          %s201 = scalar_lea.vmem %s2, %s200
        $region20: #{tpu_custom_call.1} parent=11 // pred_fallthru
          _
        // Predicated region
        $region21: #{tpu_custom_call.1} parent=11 // pred_check
          %p202 = pneg %p143
        $region22: #{tpu_custom_call.1} parent=11 // pred_check_branch
          %204 = sbr.rel (%p202) target = $region24
        $region23: #{tpu_custom_call.1} parent=11 // pred_region
          %p205 = scmp.lt.s32.totalorder %s26, 0
          %s206 = scalar_select %p205, %s26, 0
          %s207 = smul.addr %s206, 8
          %s208 = scalar_lea.vmem %s3, %s207
        $region24: #{tpu_custom_call.1} parent=11 // pred_fallthru
          _
      $region12: #{tpu_custom_call.1} parent=5 // pred_fallthru
        _
      %p209 = scmp.lt.s32.totalorder %s16, 2
      // Predicated region
      $region25: #{tpu_custom_call.1} parent=5 // pred_check
        %p210 = pneg %p209
      $region26: #{tpu_custom_call.1} parent=5 // pred_check_branch
        %212 = sbr.rel (%p210) target = $region28
      $region27: #{tpu_custom_call.1} parent=5 // pred_region
        // Predicated region
        $region29: #{tpu_custom_call.1} parent=27 // pred_check
          %p213 = pneg %p59
        $region30: #{tpu_custom_call.1} parent=27 // pred_check_branch
          %215 = sbr.rel (%p213) target = $region32
        $region31: #{tpu_custom_call.1} parent=27 // pred_region
          %s216 = sand.u32 %s49, 1
          %s217 = scalar_lea.sflag [#allocation8], %s216
          %s218 = sand.u32 %s49, 1
          %s219 = smul.addr %s218, 80
          %s220 = scalar_lea.vmem [#allocation7], %s219
          %s221 = ssub.s32 1, %s24
          %s222 = smul.u32 %s221, %s25
          %s223 = smul.u32 4, %s222
          %s225 = ssub.s32 1280, 1280
          %226 = vsyncadd %s217, %s225
          %s227 = smul.addr %s223, 64
          %s228 = scalar_lea.hbm %s0, %s227
          %s229 = sshll.u32 %s220, 4
          %s230 = int_to_ptr.vmem [resolvable:$true] %s229
          %235 = dma.hbm_to_vmem [thread:$0]  %s228, 1280, %s230, %s217, 256, 256, 16
        $region32: #{tpu_custom_call.1} parent=27 // pred_fallthru
          _
      $region28: #{tpu_custom_call.1} parent=5 // pred_fallthru
        _
      %p236 = scmp.le.s32.totalorder 1, %s16
      %p237 = scmp.lt.s32.totalorder %s16, 3
      %p238 = pnand %p236, %p237
      %p239 = pneg %p238
      // Predicated region
      $region33: #{tpu_custom_call.1} parent=5 // pred_check
        _
      $region34: #{tpu_custom_call.1} parent=5 // pred_check_branch
        %241 = sbr.rel (%p238) target = $region36
      $region35: #{tpu_custom_call.1} parent=5 // pred_region
        %s242 = ssub.s32 %s16, 1
        %s243 = sand.u32 %s52, 1
        %s244 = scalar_lea.sflag [#allocation8], %s243
        %s245 = sand.u32 %s52, 1
        %s246 = smul.addr %s245, 80
        %s247 = scalar_lea.vmem [#allocation7], %s246
        // Predicated region
        $region37: #{tpu_custom_call.1} parent=35 // pred_check
          %p248 = pneg %p65
        $region38: #{tpu_custom_call.1} parent=35 // pred_check_branch
          %250 = sbr.rel (%p248) target = $region40
        $region39: #{tpu_custom_call.1} parent=35 // pred_region
          %251 = dma.done %s244, 1280
        $region40: #{tpu_custom_call.1} parent=35 // pred_fallthru
          _
        %s252 = sand.u32 %s52, 1
        %s253 = scalar_lea.sflag [#allocation8], %s252
        %s254 = sand.u32 %s52, 1
        %s255 = smul.addr %s254, 80
        %s256 = scalar_lea.vmem [#allocation7], %s255
        %p257 = pneg %p65
        %p258 = pneg %p62
        %p259 = scmp.lt.s32.totalorder %s26, 0
        %s260 = scalar_select %p259, %s26, 0
        %s261 = smul.addr %s260, 4
        %s262 = scalar_lea.vmem %s1, %s261
        %p263 = pneg %p91
        %p264 = pneg %p88
        %p265 = scmp.lt.s32.totalorder %s26, 0
        %s266 = scalar_select %p265, %s26, 0
        %s267 = smul.addr %s266, 8
        %s268 = scalar_lea.vmem %s2, %s267
        %p269 = pneg %p117
        %p270 = pneg %p114
        %p271 = scmp.lt.s32.totalorder %s26, 0
        %s272 = scalar_select %p271, %s26, 0
        %s273 = smul.addr %s272, 8
        %s274 = scalar_lea.vmem %s3, %s273
        %p275 = pneg %p143
        %p276 = pneg %p140
        %p277 = pneg %p173
        %p278 = pneg %p170
        %s279 = sand.u32 %s160, 1
        %s280 = scalar_lea.sflag [#allocation9], %s279
        %s281 = sand.u32 %s160, 1
        %s282 = smul.addr %s281, 32
        %s283 = scalar_lea.vmem [#allocation10], %s282
        %s284 = ssub.s32 1, %s27
        %s285 = smul.u32 %s284, %s28
        %s286 = smul.u32 4, %s285
        %p287 = scmp.lt.s32.totalorder %s26, 0
        %s288 = scalar_select %p287, %s26, 0
        %s289 = smul.addr %s288, 4
        %s290 = scalar_lea.vmem %s1, %s289
        %p291 = scmp.lt.s32.totalorder %s26, 0
        %s292 = scalar_select %p291, %s26, 0
        %s293 = smul.addr %s292, 8
        %s294 = scalar_lea.vmem %s2, %s293
        %p295 = scmp.lt.s32.totalorder %s26, 0
        %s296 = scalar_select %p295, %s26, 0
        %s297 = smul.addr %s296, 8
        %s298 = scalar_lea.vmem %s3, %s297
        %s299 = smul.u32 %s27, %s28
        %s300 = smul.u32 4, %s299
        %p302 = scmp.eq.s32.totalorder %s27, 0
        %p303 = scmp.eq.s32.totalorder %s28, 0
        %p304 = pnand %p302, %p303
        %p305 = pneg %p304
        // Predicated region
        $region41: #{tpu_custom_call.1} parent=35 // pred_check
          _
        $region42: #{tpu_custom_call.1} parent=35 // pred_check_branch
          %307 = sbr.rel (%p304) target = $region44
        $region43: #{tpu_custom_call.1} parent=35 // pred_region
          %vm308 = vcmask 7168
          %309 = vst.msk [vmem:[#allocation3] sm:$0xff] %vm308, 0.0
          %310 = vst.msk [vmem:[#allocation4] sm:$0xff] %vm308, 0.0
          %311 = vst [vmem:[%s283] sm:$0xff] 0.0
          %312 = vst [vmem:[%s283 + $0x8] sm:$0xff] 0.0
          %313 = vst [vmem:[%s283 + $0x10] sm:$0xff] 0.0
          %314 = vst [vmem:[%s283 + $0x18] sm:$0xff] 0.0
        $region44: #{tpu_custom_call.1} parent=35 // pred_fallthru
          _
        // Predicated region
        $region45: #{tpu_custom_call.1} parent=35 // pred_check
          %p315 = pneg %p302
        $region46: #{tpu_custom_call.1} parent=35 // pred_check_branch
          %317 = sbr.rel (%p315) target = $region48
        $region47: #{tpu_custom_call.1} parent=35 // pred_region
          %v318 = vld [vmem:[%s290] sm:$0xf]
          %v319 = vld [vmem:[%s247] sm:$0xff]
          %v320 = vld [vmem:[%s247 + $0x8] sm:$0xff]
          %v321 = vld [vmem:[%s247 + $0x10] sm:$0xff]
          %v322 = vld [vmem:[%s247 + $0x18] sm:$0xff]
          %v323 = vld [vmem:[%s247 + $0x20] sm:$0xff]
          %v324 = vld [vmem:[%s247 + $0x28] sm:$0xff]
          %v325 = vld [vmem:[%s247 + $0x30] sm:$0xff]
          %v326 = vld [vmem:[%s247 + $0x38] sm:$0xff]
          %v327 = vld [vmem:[%s247 + $0x40] sm:$0x33]
          %v328 = vld [vmem:[%s247 + $0x48] sm:$0x33]
          %v339 = vunpack.c.l.b16 %v319
          %v340 = vunpack.c.h.b16 %v319
          %v341 = vunpack.c.l.b16 %v320
          %v342 = vunpack.c.h.b16 %v320
          %v343 = vunpack.c.l.b16 %v321
          %v344 = vunpack.c.h.b16 %v321
          %v345 = vunpack.c.l.b16 %v322
          %v346 = vunpack.c.h.b16 %v322
          %v347 = vunpack.c.l.b16 %v323
          %v348 = vunpack.c.h.b16 %v323
          %v349 = vunpack.c.l.b16 %v324
          %v350 = vunpack.c.h.b16 %v324
          %v351 = vunpack.c.l.b16 %v325
          %v352 = vunpack.c.h.b16 %v325
          %v353 = vunpack.c.l.b16 %v326
          %v354 = vunpack.c.h.b16 %v326
          %v355 = vunpack.c.l.b16 %v327
          %v356 = vunpack.c.h.b16 %v327
          %v357 = vunpack.c.l.b16 %v328
          %v358 = vunpack.c.h.b16 %v328
          %v359 = vpack.c.b16 %v343, %v339
          %v360 = vpack.c.b16 %v344, %v340
          %v361 = vpack.c.b16 %v345, %v341
          %v362 = vpack.c.b16 %v346, %v342
          %v363 = vpack.c.b16 %v351, %v347
          %v364 = vpack.c.b16 %v352, %v348
          %v365 = vpack.c.b16 %v353, %v349
          %v366 = vpack.c.b16 %v354, %v350
          %v367 = vpack.c.b16 %v355, %v355
          %v368 = vpack.c.b16 %v356, %v356
          %v369 = vpack.c.b16 %v357, %v357
          %v370 = vpack.c.b16 %v358, %v358
          %vm379 = vcmask 293888
          %v381 = vsel %vm379, %v318, 0
          %vm383 = vcmask 1041408
          %v385 = vsel %vm383, %v367, 0
          %v388 = vsel %vm383, %v368, 0
          %v391 = vsel %vm383, %v369, 0
          %v394 = vsel %vm383, %v370, 0
          %396 = vmatprep.subr.bf16.mxu0 %v360
          %397 = vmatpush1.bf16.msra.mxu0 %v359
          %398 = vmatprep.subr.bf16.mxu0 %v364
          %399 = vmatpush1.bf16.msra.mxu0 %v363
          %400 = vmatprep.subr.bf16.mxu0 %v388
          %401 = vmatpush1.bf16.msra.mxu0 %v385
          %402 = vmatprep.subr.bf16.mxu0 0
          %403 = vmatpush1.bf16.msra.mxu0 0
          %404 = vmatprep.subr.bf16.mxu0 0
          %405 = vmatpush1.bf16.msra.mxu0 0
          %406 = vmatprep.subr.bf16.mxu0 0
          %407 = vmatpush1.bf16.msra.mxu0 0
          %408 = vmatprep.subr.bf16.mxu0 0
          %409 = vmatpush1.bf16.msra.mxu0 0
          %410 = vmatprep.subr.bf16.mxu0 0
          %411 = vmatpush1.bf16.msra.mxu0 0
          %412 = vmatprep.subr.bf16.mxu0 0
          %413 = vmatpush1.bf16.msra.mxu0 0
          %414 = vmatprep.subr.bf16.mxu0 0
          %415 = vmatpush1.bf16.msra.mxu0 0
          %416 = vmatprep.subr.bf16.mxu0 0
          %417 = vmatpush1.bf16.msra.mxu0 0
          %418 = vmatprep.subr.bf16.mxu0 0
          %419 = vmatpush1.bf16.msra.mxu0 0
          %420 = vmatprep.subr.bf16.mxu0 0
          %421 = vmatpush1.bf16.msra.mxu0 0
          %422 = vmatprep.subr.bf16.mxu0 0
          %423 = vmatpush1.bf16.msra.mxu0 0
          %424 = vmatprep.subr.bf16.mxu0 0
          %425 = vmatpush1.bf16.msra.mxu0 0
          %426 = vmatprep.subr.bf16.mxu0 0
          %427 = vmatpush1.bf16.msra.mxu0 0
          %428 = vmatprep.mubr.bf16.mxu0 0
          %429 = vmatmul.mubr.bf16.gmra.mrb[0].mxu0 %v381
          %v430 = vpop.f32.mrb[0].mxu0
          %v431 = vadd.f32 0.0, %v430
          %v432 = vpop.f32.mrb[0].mxu0
          %v433 = vadd.f32 0.0, %v432
          %v434 = vpop.f32.mrb[0].mxu0
          %v435 = vpop.f32.mrb[0].mxu0
          %436 = vdwg.mxu0
          %437 = vmatprep.subr.bf16.mxu0 %v362
          %438 = vmatpush1.bf16.msra.mxu0 %v361
          %439 = vmatprep.subr.bf16.mxu0 %v366
          %440 = vmatpush1.bf16.msra.mxu0 %v365
          %441 = vmatprep.subr.bf16.mxu0 %v394
          %442 = vmatpush1.bf16.msra.mxu0 %v391
          %443 = vmatprep.subr.bf16.mxu0 0
          %444 = vmatpush1.bf16.msra.mxu0 0
          %445 = vmatprep.subr.bf16.mxu0 0
          %446 = vmatpush1.bf16.msra.mxu0 0
          %447 = vmatprep.subr.bf16.mxu0 0
          %448 = vmatpush1.bf16.msra.mxu0 0
          %449 = vmatprep.subr.bf16.mxu0 0
          %450 = vmatpush1.bf16.msra.mxu0 0
          %451 = vmatprep.subr.bf16.mxu0 0
          %452 = vmatpush1.bf16.msra.mxu0 0
          %453 = vmatprep.subr.bf16.mxu0 0
          %454 = vmatpush1.bf16.msra.mxu0 0
          %455 = vmatprep.subr.bf16.mxu0 0
          %456 = vmatpush1.bf16.msra.mxu0 0
          %457 = vmatprep.subr.bf16.mxu0 0
          %458 = vmatpush1.bf16.msra.mxu0 0
          %459 = vmatprep.subr.bf16.mxu0 0
          %460 = vmatpush1.bf16.msra.mxu0 0
          %461 = vmatprep.subr.bf16.mxu0 0
          %462 = vmatpush1.bf16.msra.mxu0 0
          %463 = vmatprep.subr.bf16.mxu0 0
          %464 = vmatpush1.bf16.msra.mxu0 0
          %465 = vmatprep.subr.bf16.mxu0 0
          %466 = vmatpush1.bf16.msra.mxu0 0
          %467 = vmatprep.subr.bf16.mxu0 0
          %468 = vmatpush1.bf16.msra.mxu0 0
          %469 = vmatprep.mubr.bf16.mxu0 0
          %470 = vmatmul.mubr.bf16.gmra.mrb[0].mxu0 %v381
          %v471 = vpop.f32.mrb[0].mxu0
          %v472 = vadd.f32 0.0, %v471
          %v473 = vpop.f32.mrb[0].mxu0
          %v474 = vadd.f32 0.0, %v473
          %v475 = vpop.f32.mrb[0].mxu0
          %v476 = vpop.f32.mrb[0].mxu0
          %477 = vdwg.mxu0
          %v478 = vpack.c.bf16 %v431, %v431
          %v479 = vpack.c.bf16 %v433, %v433
          %v480 = vpack.c.bf16 %v472, %v472
          %v481 = vpack.c.bf16 %v474, %v474
          %v486 = vunpack.c.l.b16 %v478
          %v487 = vunpack.c.l.b16 %v479
          %v488 = vunpack.c.l.b16 %v480
          %v489 = vunpack.c.l.b16 %v481
          %v490 = vpack.c.b16 %v487, %v486
          %v491 = vpack.c.b16 %v489, %v488
          %s494 = smul.u32 %s28, 4
          %s495 = smul.addr %s494, 4
          %s496 = scalar_lea.vmem [#allocation2], %s495
          %497 = vst [vmem:[%s496] sm:$0xff] %v490
          %498 = vst [vmem:[%s496 + $0x8] sm:$0xff] %v491
          %v499 = vld [vmem:[#allocation3] sm:$0xff]
          %v500 = vadd.f32 %v431, %v433
          %v501 = vadd.f32 %v500, %v472
          %v502 = vadd.f32 %v501, %v474
          %503 = vadd.xlane.f32.xlu0 %v502
          %v504 = vpop.xlane.xlu0 %503
          %v505 = vadd.f32 %v499, %v504
          %vm506 = vcmask 7168
          %507 = vst.msk [vmem:[#allocation3] sm:$0xff] %vm506, %v505
          %v508 = vld [vmem:[#allocation4] sm:$0xff]
          %v509 = vmul.f32 %v431, %v431
          %v510 = vmul.f32 %v433, %v433
          %v511 = vmul.f32 %v472, %v472
          %v512 = vmul.f32 %v474, %v474
          %v513 = vadd.f32 %v509, %v510
          %v514 = vadd.f32 %v513, %v511
          %v515 = vadd.f32 %v514, %v512
          %516 = vadd.xlane.f32.xlu0 %v515
          %v517 = vpop.xlane.xlu0 %516
          %v518 = vadd.f32 %v508, %v517
          %519 = vst.msk [vmem:[#allocation4] sm:$0xff] %vm506, %v518
        $region48: #{tpu_custom_call.1} parent=35 // pred_fallthru
          _
        %p520 = scmp.eq.s32.totalorder %s27, 1
        %p521 = pnand %p520, %p303
        %p522 = pneg %p521
        // Predicated region
        $region49: #{tpu_custom_call.1} parent=35 // pred_check
          _
        $region50: #{tpu_custom_call.1} parent=35 // pred_check_branch
          %524 = sbr.rel (%p521) target = $region52
        $region51: #{tpu_custom_call.1} parent=35 // pred_region
          %v525 = vld [vmem:[#allocation3] sm:$0xff]
          %v526 = vmul.f32 %v525, 0.001953125
          %v527 = vld [vmem:[#allocation4] sm:$0xff]
          %v528 = vmul.f32 %v527, 0.001953125
          %v529 = vmul.f32 %v526, %v526
          %v530 = vsub.f32 %v528, %v529
          %v531 = vmax.f32 %v530, 0.0
          %v532 = vld [vmem:[%s294] sm:$0xff]
          %v533 = vadd.f32 %v531, 1e-05
          %v534 = vrsqrt.pop %v533
          %v535 = vmul.f32 %v532, %v534
          %vm536 = vcmask 7168
          %537 = vst.msk [vmem:[#allocation5] sm:$0xff] %vm536, %v535
          %v538 = vld [vmem:[%s298] sm:$0xff]
          %v539 = vmul.f32 %v526, %v535
          %v540 = vsub.f32 %v538, %v539
          %541 = vst.msk [vmem:[#allocation6] sm:$0xff] %vm536, %v540
        $region52: #{tpu_custom_call.1} parent=35 // pred_fallthru
          _
        // Predicated region
        $region53: #{tpu_custom_call.1} parent=35 // pred_check
          %p542 = pneg %p520
        $region54: #{tpu_custom_call.1} parent=35 // pred_check_branch
          %544 = sbr.rel (%p542) target = $region56
        $region55: #{tpu_custom_call.1} parent=35 // pred_region
          %s545 = smul.u32 %s28, 4
          %s546 = smul.addr %s545, 4
          %s547 = scalar_lea.vmem [#allocation2], %s546
          %v548 = vld [vmem:[%s547] sm:$0xff]
          %v549 = vld [vmem:[%s547 + $0x8] sm:$0xff]
          %v550 = vunpack.c.l.bf16 %v548
          %v551 = vunpack.c.h.bf16 %v548
          %v552 = vunpack.c.l.bf16 %v549
          %v553 = vunpack.c.h.bf16 %v549
          %v554 = vld [vmem:[#allocation5] sm:$0xff]
          %556 = vset.pattern.permute.xlu0 0
          %557 = vperm.xlu0 %556, %v554
          %v558 = vpop.permute.xlu0 %557
          %v560 = vmul.f32 %v550, %v558
          %v561 = vmul.f32 %v551, %v558
          %v562 = vmul.f32 %v552, %v558
          %v563 = vmul.f32 %v553, %v558
          %v564 = vld [vmem:[#allocation6] sm:$0xff]
          %566 = vset.pattern.permute.xlu0 0
          %567 = vperm.xlu0 %566, %v564
          %v568 = vpop.permute.xlu0 %567
          %v570 = vadd.f32 %v560, %v568
          %v571 = vadd.f32 %v561, %v568
          %v572 = vadd.f32 %v562, %v568
          %v573 = vadd.f32 %v563, %v568
          %vm574 = vcmp.ge.f32.partialorder %v570, 0.0
          %vm575 = vcmp.ge.f32.partialorder %v571, 0.0
          %vm576 = vcmp.ge.f32.partialorder %v572, 0.0
          %vm577 = vcmp.ge.f32.partialorder %v573, 0.0
          %v578 = vmul.f32 %v570, 0.1
          %v579 = vmul.f32 %v571, 0.1
          %v580 = vmul.f32 %v572, 0.1
          %v581 = vmul.f32 %v573, 0.1
          %v582 = vsel %vm574, %v570, %v578
          %v583 = vsel %vm575, %v571, %v579
          %v584 = vsel %vm576, %v572, %v580
          %v585 = vsel %vm577, %v573, %v581
          %586 = vst [vmem:[%s283] sm:$0xff] %v582
          %587 = vst [vmem:[%s283 + $0x8] sm:$0xff] %v583
          %588 = vst [vmem:[%s283 + $0x10] sm:$0xff] %v584
          %589 = vst [vmem:[%s283 + $0x18] sm:$0xff] %v585
        $region56: #{tpu_custom_call.1} parent=35 // pred_fallthru
          _
        %s590 = sand.u32 %s160, 1
        %s591 = scalar_lea.sflag [#allocation9], %s590
        %s592 = sand.u32 %s160, 1
        %s593 = smul.addr %s592, 32
        %s594 = scalar_lea.vmem [#allocation10], %s593
        // Predicated region
        $region57: #{tpu_custom_call.1} parent=35 // pred_check
          %p595 = pneg %p170
        $region58: #{tpu_custom_call.1} parent=35 // pred_check_branch
          %597 = sbr.rel (%p595) target = $region60
        $region59: #{tpu_custom_call.1} parent=35 // pred_region
          %s598 = smul.u32 %s27, %s28
          %s599 = smul.u32 4, %s598
          %s601 = ssub.s32 512, 512
          %602 = vsyncadd %s591, %s601
          %s603 = smul.addr %s26, 4
          %s604 = sadd.s32 %s599, %s603
          %s605 = smul.addr %s604, 128
          %s606 = scalar_lea.hbm %s4, %s605
          %s608 = sshll.u32 %s594, 4
          %s609 = int_to_ptr.vmem [resolvable:$true] %s608
          %611 = dma.vmem_to_hbm [thread:$0]  %s609, 512, %s606, %s591
        $region60: #{tpu_custom_call.1} parent=35 // pred_fallthru
          _
      $region36: #{tpu_custom_call.1} parent=5 // pred_fallthru
        _
      %p612 = scmp.le.s32.totalorder 2, %s16
      // Predicated region
      $region61: #{tpu_custom_call.1} parent=5 // pred_check
        %p613 = pneg %p612
      $region62: #{tpu_custom_call.1} parent=5 // pred_check_branch
        %615 = sbr.rel (%p613) target = $region64
      $region63: #{tpu_custom_call.1} parent=5 // pred_region
        %s616 = ssub.s32 %s16, 2
        // Predicated region
        $region65: #{tpu_custom_call.1} parent=63 // pred_check
          %p617 = pneg %p176
        $region66: #{tpu_custom_call.1} parent=63 // pred_check_branch
          %619 = sbr.rel (%p617) target = $region68
        $region67: #{tpu_custom_call.1} parent=63 // pred_region
          %s620 = sand.u32 %s161, 1
          %s621 = scalar_lea.sflag [#allocation9], %s620
          %s622 = sand.u32 %s161, 1
          %s623 = smul.addr %s622, 32
          %s624 = scalar_lea.vmem [#allocation10], %s623
          %625 = dma.done %s621, 512
        $region68: #{tpu_custom_call.1} parent=63 // pred_fallthru
          _
      $region64: #{tpu_custom_call.1} parent=5 // pred_fallthru
        _
    $region6: #{tpu_custom_call.1} parent=1 // loop_footer
      %s20 = sadd.s32 1, %s16
    $region7: #{tpu_custom_call.1} parent=1 // loop_footer_branch
      %15 = sbr.rel target = $region3
    $region8: #{tpu_custom_call.1} parent=1 // loop_exit
      _
    %626 = vsyncpa [#allocation8], 1
    %s627 = scalar_lea.sflag [#allocation8], 1
    %628 = vsyncpa %s627, 1
    %629 = vsyncpa [#allocation9], 1
    %s630 = scalar_lea.sflag [#allocation9], 1
    %631 = vsyncpa %s630, 1

</llo_original>
